<compile_context>
chip_gen: v5e
topology: v5e:2x2
jax: 0.10.0
libtpu: 0.0.40
codegen_flags: <defaults>
</compile_context>

<pallas_src>
import jax
import jax.numpy as jnp
from jax.experimental import pallas as pl
from jax.experimental.pallas import tpu as pltpu


def _attention_kernel(g_ref, x_ref, wg_ref, wx_ref, bh_ref, wp_ref, bp_ref,
                      out_ref):
    # g_ref: (F_g, TM), x_ref: (F_l, TM) -- channels on sublanes, pixels on
    # lanes (lane-dense).  Weight/bias refs are tiny resident VMEM blocks.
    g = g_ref[...]
    x = x_ref[...]
    wg = wg_ref[...]                       # (F_int, F_g)  BN-folded
    wx = wx_ref[...]                       # (F_int, F_l)  BN-folded
    f_g = g.shape[0]
    f_l = x.shape[0]

    # Gating 1x1 convs as unrolled VPU outer-product FMAs (K is tiny; keeps
    # MXU push/pop latency off the critical path).  acc: (F_int, TM).
    acc = wg[:, 0:1] * g[0:1, :]
    for k in range(1, f_g):
        acc = acc + wg[:, k:k + 1] * g[k:k + 1, :]
    for k in range(f_l):
        acc = acc + wx[:, k:k + 1] * x[k:k + 1, :]
    h = jnp.maximum(acc + bh_ref[...], 0.0)             # ReLU, (F_int, TM)

    # psi 1x1 conv (F_int -> 1): sublane-weighted reduction (no N=1 matmul).
    psi = jnp.sum(wp_ref[...] * h, axis=0, keepdims=True) + bp_ref[...]
    # Sigmoid: exp on the EUP, reciprocal instead of an explicit VALU divide.
    # (approx=True would move it fully onto the EUP at ~2^-12 gate error.)
    psi = pl.reciprocal(1.0 + jnp.exp(-psi), approx=False)      # (1, TM)

    out_ref[...] = (x * psi).astype(out_ref.dtype)    # gate x, lane-dense store


def attention_block_pallas(g_pix, x_pix, wg, wx, bh, wp, bp, *, tm=None):
    """g_pix: (N, F_g, P), x_pix: (N, F_l, P); weights already BN-folded.

    Channels sit on the sublane axis, pixels on the lane axis; the pixel axis
    is tiled in multiples of 128 (tail blocks are masked by Pallas, so P need
    not divide the tile).
    """
    N, F_g, P = g_pix.shape
    _, F_l, _ = x_pix.shape
    F_int = wg.shape[0]

    if tm is None:
        # Large lane-dense pixel tiles amortise per-step pipeline overhead;
        # VMEM per double-buffered block stays well under 2 MiB even at 8192,
        # which also fits v7x's smaller (64 MiB physical) VMEM comfortably.
        tm = min(8192, pl.cdiv(P, 128) * 128)

    grid = (N, pl.cdiv(P, tm))              # both axes independent -> parallel
    full = lambda shape: pl.BlockSpec(shape, lambda n, m: (0, 0))

    grid_spec = pltpu.PrefetchScalarGridSpec(
        num_scalar_prefetch=0,
        grid=grid,
        in_specs=[
            pl.BlockSpec((None, F_g, tm), lambda n, m: (n, 0, m)),   # g tile
            pl.BlockSpec((None, F_l, tm), lambda n, m: (n, 0, m)),   # x tile
            full((F_int, F_g)),     # W_g (BN-folded)
            full((F_int, F_l)),     # W_x (BN-folded)
            full((F_int, 1)),       # b_g + b_x (fused, BN-folded)
            full((F_int, 1)),       # W_psi as a column (BN-folded)
            full((1, 1)),           # b_psi (BN-folded)
        ],
        out_specs=pl.BlockSpec((None, F_l, tm), lambda n, m: (n, 0, m)),
    )
    return pl.pallas_call(
        _attention_kernel,
        out_shape=jax.ShapeDtypeStruct((N, F_l, P), x_pix.dtype),
        grid_spec=grid_spec,
        compiler_params=pltpu.CompilerParams(
            dimension_semantics=("parallel", "parallel")),
    )(g_pix, x_pix, wg, wx, bh, wp, bp)


def fold_bn(w, b, gamma, beta, mean, var, eps=1e-5):
    """Fold inference-mode BatchNorm into a 1x1 conv (w: (C_out, C_in))."""
    scale = gamma / jnp.sqrt(var + eps)
    w_f = w * scale[:, None]
    b_f = (b - mean) * scale + beta
    return w_f, b_f


def attention_block(g_nchw, x_nchw, params, *, tm=None):
    """NCHW inputs, NCHW output, matching the PyTorch module (inference BN)."""
    N, F_g, H, W = g_nchw.shape
    _, F_l, _, _ = x_nchw.shape

    wg, bg = fold_bn(params["wg"], params["bg"], params["bn_g_gamma"],
                     params["bn_g_beta"], params["bn_g_mean"], params["bn_g_var"])
    wx, bx = fold_bn(params["wx"], params["bx"], params["bn_x_gamma"],
                     params["bn_x_beta"], params["bn_x_mean"], params["bn_x_var"])
    wp, bp = fold_bn(params["wp"], params["bp"], params["bn_p_gamma"],
                     params["bn_p_beta"], params["bn_p_mean"], params["bn_p_var"])
    F_int = wg.shape[0]

    # NCHW -> (N, C, H*W): channels stay on sublanes, pixels go on lanes.
    # Pure reshape -- no transposes, no extra HBM round trips.
    g_pix = g_nchw.reshape(N, F_g, H * W)
    x_pix = x_nchw.reshape(N, F_l, H * W)

    out_pix = attention_block_pallas(
        g_pix, x_pix,
        wg, wx,
        (bg + bx).reshape(F_int, 1),      # fused gating bias
        wp.reshape(F_int, 1),             # (1, F_int) -> column
        bp.reshape(1, 1),
        tm=tm)
    return out_pix.reshape(N, F_l, H, W)


def reference(g_nchw, x_nchw, params):
    """Plain-JAX reference (same BN folding) for correctness check."""
    wg, bg = fold_bn(params["wg"], params["bg"], params["bn_g_gamma"],
                     params["bn_g_beta"], params["bn_g_mean"], params["bn_g_var"])
    wx, bx = fold_bn(params["wx"], params["bx"], params["bn_x_gamma"],
                     params["bn_x_beta"], params["bn_x_mean"], params["bn_x_var"])
    wp, bp = fold_bn(params["wp"], params["bp"], params["bn_p_gamma"],
                     params["bn_p_beta"], params["bn_p_mean"], params["bn_p_var"])
    g1 = jnp.einsum("oc,nchw->nohw", wg, g_nchw) + bg[None, :, None, None]
    x1 = jnp.einsum("oc,nchw->nohw", wx, x_nchw) + bx[None, :, None, None]
    h = jnp.maximum(g1 + x1, 0.0)
    psi_lin = jnp.einsum("oc,nchw->nohw", wp, h) + bp[None, :, None, None]
    psi = 1.0 / (1.0 + jnp.exp(-psi_lin))
    return x_nchw * psi


if __name__ == "__main__":
    # Small shapes consistent with the module: F_g = F_l = 4, F_int = 8
    N, F_g, F_l, F_int, H, W = 2, 4, 4, 8, 16, 16
    key = jax.random.PRNGKey(0)
    ks = jax.random.split(key, 8)

    params = {
        # 1x1 conv weights stored as (C_out, C_in) channel matrices
        "wg": jax.random.normal(ks[0], (F_int, F_g), jnp.float32) * 0.1,
        "bg": jax.random.normal(ks[1], (F_int,), jnp.float32) * 0.1,
        "wx": jax.random.normal(ks[2], (F_int, F_l), jnp.float32) * 0.1,
        "bx": jax.random.normal(ks[3], (F_int,), jnp.float32) * 0.1,
        "wp": jax.random.normal(ks[4], (1, F_int), jnp.float32) * 0.1,
        "bp": jax.random.normal(ks[5], (1,), jnp.float32) * 0.1,
        # BatchNorm params (inference-mode running stats + affine)
        "bn_g_gamma": jnp.ones((F_int,), jnp.float32) * 1.1,
        "bn_g_beta": jnp.full((F_int,), 0.05, jnp.float32),
        "bn_g_mean": jnp.full((F_int,), 0.02, jnp.float32),
        "bn_g_var": jnp.ones((F_int,), jnp.float32) * 1.3,
        "bn_x_gamma": jnp.ones((F_int,), jnp.float32) * 0.9,
        "bn_x_beta": jnp.full((F_int,), -0.05, jnp.float32),
        "bn_x_mean": jnp.full((F_int,), -0.01, jnp.float32),
        "bn_x_var": jnp.ones((F_int,), jnp.float32) * 0.8,
        "bn_p_gamma": jnp.ones((1,), jnp.float32) * 1.05,
        "bn_p_beta": jnp.full((1,), 0.01, jnp.float32),
        "bn_p_mean": jnp.full((1,), 0.005, jnp.float32),
        "bn_p_var": jnp.ones((1,), jnp.float32) * 1.1,
    }

    g_in = jax.random.normal(ks[6], (N, F_g, H, W), jnp.float32)
    x_in = jax.random.normal(ks[7], (N, F_l, H, W), jnp.float32)

    out = attention_block(g_in, x_in, params)
    jax.block_until_ready(out)

    ref = reference(g_in, x_in, params)
    assert out.shape == (N, F_l, H, W)
    assert jnp.allclose(out, ref, atol=1e-5, rtol=1e-5)

    print("KERNEL_OK")
</pallas_src>

<mosaic_0001>
module attributes {stable_mosaic.version = 11 : i64} {
  func.func @_attention_kernel(%arg0: i32, %arg1: i32, %arg2: memref<1x4x256xf32, #tpu.memory_space<vmem>>, %arg3: memref<1x4x256xf32, #tpu.memory_space<vmem>>, %arg4: memref<8x4xf32, #tpu.memory_space<vmem>>, %arg5: memref<8x4xf32, #tpu.memory_space<vmem>>, %arg6: memref<8x1xf32, #tpu.memory_space<vmem>>, %arg7: memref<8x1xf32, #tpu.memory_space<vmem>>, %arg8: memref<1x1xf32, #tpu.memory_space<vmem>>, %arg9: memref<1x4x256xf32, #tpu.memory_space<vmem>>) attributes {dimension_semantics = [#tpu.dimension_semantics<parallel>, #tpu.dimension_semantics<parallel>], iteration_bounds = array<i64: 2, 1>, scalar_prefetch = 0 : i64, scratch_operands = 0 : i64, tpu.core_type = #tpu.core_type<tc>, window_params = [{transform_indices = @transform_0, window_bounds = array<i64: 1, 4, 256>}, {transform_indices = @transform_1, window_bounds = array<i64: 1, 4, 256>}, {pipeline_mode = #tpu.pipeline_mode<synchronous>, transform_indices = @transform_2, window_bounds = array<i64: 8, 4>}, {pipeline_mode = #tpu.pipeline_mode<synchronous>, transform_indices = @transform_3, window_bounds = array<i64: 8, 4>}, {pipeline_mode = #tpu.pipeline_mode<synchronous>, transform_indices = @transform_4, window_bounds = array<i64: 8, 1>}, {pipeline_mode = #tpu.pipeline_mode<synchronous>, transform_indices = @transform_5, window_bounds = array<i64: 8, 1>}, {pipeline_mode = #tpu.pipeline_mode<synchronous>, transform_indices = @transform_6, window_bounds = array<i64: 1, 1>}, {transform_indices = @transform_7, window_bounds = array<i64: 1, 4, 256>}]} {
    %c0 = arith.constant 0 : index
    %c0_0 = arith.constant 0 : index
    %c0_1 = arith.constant 0 : index
    %0 = vector.load %arg2[%c0, %c0_0, %c0_1] : memref<1x4x256xf32, #tpu.memory_space<vmem>>, vector<1x4x256xf32>
    %1 = vector.shape_cast %0 : vector<1x4x256xf32> to vector<4x256xf32>
    %c0_2 = arith.constant 0 : index
    %c0_3 = arith.constant 0 : index
    %c0_4 = arith.constant 0 : index
    %2 = vector.load %arg3[%c0_2, %c0_3, %c0_4] : memref<1x4x256xf32, #tpu.memory_space<vmem>>, vector<1x4x256xf32>
    %3 = vector.shape_cast %2 : vector<1x4x256xf32> to vector<4x256xf32>
    %c0_5 = arith.constant 0 : index
    %c0_6 = arith.constant 0 : index
    %4 = vector.load %arg4[%c0_5, %c0_6] : memref<8x4xf32, #tpu.memory_space<vmem>>, vector<8x4xf32>
    %c0_7 = arith.constant 0 : index
    %c0_8 = arith.constant 0 : index
    %5 = vector.load %arg5[%c0_7, %c0_8] : memref<8x4xf32, #tpu.memory_space<vmem>>, vector<8x4xf32>
    %6 = vector.extract_strided_slice %4 {offsets = [0, 0], sizes = [8, 1], strides = [1, 1]} : vector<8x4xf32> to vector<8x1xf32>
    %7 = vector.extract_strided_slice %1 {offsets = [0, 0], sizes = [1, 256], strides = [1, 1]} : vector<4x256xf32> to vector<1x256xf32>
    %8 = vector.broadcast %6 : vector<8x1xf32> to vector<8x256xf32>
    %9 = vector.broadcast %7 : vector<1x256xf32> to vector<8x256xf32>
    %10 = arith.mulf %8, %9 : vector<8x256xf32>
    %11 = vector.extract_strided_slice %4 {offsets = [0, 1], sizes = [8, 1], strides = [1, 1]} : vector<8x4xf32> to vector<8x1xf32>
    %12 = vector.extract_strided_slice %1 {offsets = [1, 0], sizes = [1, 256], strides = [1, 1]} : vector<4x256xf32> to vector<1x256xf32>
    %13 = vector.broadcast %11 : vector<8x1xf32> to vector<8x256xf32>
    %14 = vector.broadcast %12 : vector<1x256xf32> to vector<8x256xf32>
    %15 = arith.mulf %13, %14 : vector<8x256xf32>
    %16 = arith.addf %10, %15 : vector<8x256xf32>
    %17 = vector.extract_strided_slice %4 {offsets = [0, 2], sizes = [8, 1], strides = [1, 1]} : vector<8x4xf32> to vector<8x1xf32>
    %18 = vector.extract_strided_slice %1 {offsets = [2, 0], sizes = [1, 256], strides = [1, 1]} : vector<4x256xf32> to vector<1x256xf32>
    %19 = vector.broadcast %17 : vector<8x1xf32> to vector<8x256xf32>
    %20 = vector.broadcast %18 : vector<1x256xf32> to vector<8x256xf32>
    %21 = arith.mulf %19, %20 : vector<8x256xf32>
    %22 = arith.addf %16, %21 : vector<8x256xf32>
    %23 = vector.extract_strided_slice %4 {offsets = [0, 3], sizes = [8, 1], strides = [1, 1]} : vector<8x4xf32> to vector<8x1xf32>
    %24 = vector.extract_strided_slice %1 {offsets = [3, 0], sizes = [1, 256], strides = [1, 1]} : vector<4x256xf32> to vector<1x256xf32>
    %25 = vector.broadcast %23 : vector<8x1xf32> to vector<8x256xf32>
    %26 = vector.broadcast %24 : vector<1x256xf32> to vector<8x256xf32>
    %27 = arith.mulf %25, %26 : vector<8x256xf32>
    %28 = arith.addf %22, %27 : vector<8x256xf32>
    %29 = vector.extract_strided_slice %5 {offsets = [0, 0], sizes = [8, 1], strides = [1, 1]} : vector<8x4xf32> to vector<8x1xf32>
    %30 = vector.extract_strided_slice %3 {offsets = [0, 0], sizes = [1, 256], strides = [1, 1]} : vector<4x256xf32> to vector<1x256xf32>
    %31 = vector.broadcast %29 : vector<8x1xf32> to vector<8x256xf32>
    %32 = vector.broadcast %30 : vector<1x256xf32> to vector<8x256xf32>
    %33 = arith.mulf %31, %32 : vector<8x256xf32>
    %34 = arith.addf %28, %33 : vector<8x256xf32>
    %35 = vector.extract_strided_slice %5 {offsets = [0, 1], sizes = [8, 1], strides = [1, 1]} : vector<8x4xf32> to vector<8x1xf32>
    %36 = vector.extract_strided_slice %3 {offsets = [1, 0], sizes = [1, 256], strides = [1, 1]} : vector<4x256xf32> to vector<1x256xf32>
    %37 = vector.broadcast %35 : vector<8x1xf32> to vector<8x256xf32>
    %38 = vector.broadcast %36 : vector<1x256xf32> to vector<8x256xf32>
    %39 = arith.mulf %37, %38 : vector<8x256xf32>
    %40 = arith.addf %34, %39 : vector<8x256xf32>
    %41 = vector.extract_strided_slice %5 {offsets = [0, 2], sizes = [8, 1], strides = [1, 1]} : vector<8x4xf32> to vector<8x1xf32>
    %42 = vector.extract_strided_slice %3 {offsets = [2, 0], sizes = [1, 256], strides = [1, 1]} : vector<4x256xf32> to vector<1x256xf32>
    %43 = vector.broadcast %41 : vector<8x1xf32> to vector<8x256xf32>
    %44 = vector.broadcast %42 : vector<1x256xf32> to vector<8x256xf32>
    %45 = arith.mulf %43, %44 : vector<8x256xf32>
    %46 = arith.addf %40, %45 : vector<8x256xf32>
    %47 = vector.extract_strided_slice %5 {offsets = [0, 3], sizes = [8, 1], strides = [1, 1]} : vector<8x4xf32> to vector<8x1xf32>
    %48 = vector.extract_strided_slice %3 {offsets = [3, 0], sizes = [1, 256], strides = [1, 1]} : vector<4x256xf32> to vector<1x256xf32>
    %49 = vector.broadcast %47 : vector<8x1xf32> to vector<8x256xf32>
    %50 = vector.broadcast %48 : vector<1x256xf32> to vector<8x256xf32>
    %51 = arith.mulf %49, %50 : vector<8x256xf32>
    %52 = arith.addf %46, %51 : vector<8x256xf32>
    %c0_9 = arith.constant 0 : index
    %c0_10 = arith.constant 0 : index
    %53 = vector.load %arg6[%c0_9, %c0_10] : memref<8x1xf32, #tpu.memory_space<vmem>>, vector<8x1xf32>
    %54 = vector.broadcast %53 : vector<8x1xf32> to vector<8x256xf32>
    %55 = arith.addf %52, %54 : vector<8x256xf32>
    %cst = arith.constant 0.000000e+00 : f32
    %56 = vector.broadcast %cst : f32 to vector<8x256xf32>
    %57 = arith.maximumf %55, %56 : vector<8x256xf32>
    %c0_11 = arith.constant 0 : index
    %c0_12 = arith.constant 0 : index
    %58 = vector.load %arg7[%c0_11, %c0_12] : memref<8x1xf32, #tpu.memory_space<vmem>>, vector<8x1xf32>
    %59 = vector.broadcast %58 : vector<8x1xf32> to vector<8x256xf32>
    %60 = arith.mulf %59, %57 : vector<8x256xf32>
    %cst_13 = arith.constant dense<0.000000e+00> : vector<256xf32>
    %61 = vector.multi_reduction <add>, %60, %cst_13 [0] : vector<8x256xf32> to vector<256xf32>
    %62 = vector.shape_cast %61 : vector<256xf32> to vector<1x256xf32>
    %c0_14 = arith.constant 0 : index
    %c0_15 = arith.constant 0 : index
    %63 = vector.load %arg8[%c0_14, %c0_15] : memref<1x1xf32, #tpu.memory_space<vmem>>, vector<1x1xf32>
    %64 = vector.broadcast %63 : vector<1x1xf32> to vector<1x256xf32>
    %65 = arith.addf %62, %64 : vector<1x256xf32>
    %cst_16 = arith.constant 0.000000e+00 : f32
    %66 = vector.broadcast %cst_16 : f32 to vector<1x256xf32>
    %67 = arith.subf %66, %65 : vector<1x256xf32>
    %68 = math.exp %67 : vector<1x256xf32>
    %cst_17 = arith.constant 1.000000e+00 : f32
    %69 = vector.broadcast %cst_17 : f32 to vector<1x256xf32>
    %70 = arith.addf %69, %68 : vector<1x256xf32>
    %71 = tpu.reciprocal %70 : vector<1x256xf32> -> vector<1x256xf32>
    %72 = vector.broadcast %71 : vector<1x256xf32> to vector<4x256xf32>
    %73 = arith.mulf %3, %72 : vector<4x256xf32>
    %c0_18 = arith.constant 0 : index
    %c0_19 = arith.constant 0 : index
    %c0_20 = arith.constant 0 : index
    %74 = vector.load %arg9[%c0_18, %c0_19, %c0_20] : memref<1x4x256xf32, #tpu.memory_space<vmem>>, vector<1x4x256xf32>
    %75 = vector.shape_cast %74 : vector<1x4x256xf32> to vector<4x256xf32>
    %76 = vector.shape_cast %73 : vector<4x256xf32> to vector<1x4x256xf32>
    tpu.vector_store %arg9[%c0_18, %c0_19, %c0_20], %76 {strides = array<i32>} : memref<1x4x256xf32, #tpu.memory_space<vmem>>, vector<1x4x256xf32>,
    return
  }
  func.func @transform_0(%arg0: i32, %arg1: i32) -> (i32, i32, i32) {
    %c0_i32 = arith.constant 0 : i32
    %c0_i32_0 = arith.constant 0 : i32
    return %arg0, %c0_i32, %arg1 : i32, i32, i32
  }
  func.func @transform_1(%arg0: i32, %arg1: i32) -> (i32, i32, i32) {
    %c0_i32 = arith.constant 0 : i32
    %c0_i32_0 = arith.constant 0 : i32
    return %arg0, %c0_i32, %arg1 : i32, i32, i32
  }
  func.func @transform_2(%arg0: i32, %arg1: i32) -> (i32, i32) {
    %c0_i32 = arith.constant 0 : i32
    %c0_i32_0 = arith.constant 0 : i32
    %c0_i32_1 = arith.constant 0 : i32
    return %c0_i32, %c0_i32_0 : i32, i32
  }
  func.func @transform_3(%arg0: i32, %arg1: i32) -> (i32, i32) {
    %c0_i32 = arith.constant 0 : i32
    %c0_i32_0 = arith.constant 0 : i32
    %c0_i32_1 = arith.constant 0 : i32
    return %c0_i32, %c0_i32_0 : i32, i32
  }
  func.func @transform_4(%arg0: i32, %arg1: i32) -> (i32, i32) {
    %c0_i32 = arith.constant 0 : i32
    %c0_i32_0 = arith.constant 0 : i32
    %c0_i32_1 = arith.constant 0 : i32
    return %c0_i32, %c0_i32_0 : i32, i32
  }
  func.func @transform_5(%arg0: i32, %arg1: i32) -> (i32, i32) {
    %c0_i32 = arith.constant 0 : i32
    %c0_i32_0 = arith.constant 0 : i32
    %c0_i32_1 = arith.constant 0 : i32
    return %c0_i32, %c0_i32_0 : i32, i32
  }
  func.func @transform_6(%arg0: i32, %arg1: i32) -> (i32, i32) {
    %c0_i32 = arith.constant 0 : i32
    %c0_i32_0 = arith.constant 0 : i32
    %c0_i32_1 = arith.constant 0 : i32
    return %c0_i32, %c0_i32_0 : i32, i32
  }
  func.func @transform_7(%arg0: i32, %arg1: i32) -> (i32, i32, i32) {
    %c0_i32 = arith.constant 0 : i32
    %c0_i32_0 = arith.constant 0 : i32
    return %arg0, %c0_i32, %arg1 : i32, i32, i32
  }
}

</mosaic_0001>

<llo_original>
// kernel: tpu_custom_call.1
$region0: #{tpu_custom_call.1}
  #allocation0 [shape = 'u32[]', space=smem, size = 0x4, offset = 0x4, fixed_abs, tag = 'smem constant byte address 0x4 - core index']
  #allocation1 [shape = 'u32[72,128]{1,0:T(1,128)}', space=vmem, size = 0x9000, scoped, tag = 'internal scratch']
  #allocation2 [shape = 'f32[1,1]{1,0:T(1,128)S(1)}', space=vmem, size = 0x200, scoped, tag = 'scoped memory for tpu_custom_call.1']
  %s0 = inlined_call_operand.vmem [shape: f32[2,4,256], index: 0, kind: input, shape index: {}]
  %s1 = inlined_call_operand.hbm [shape: f32[2,4,256], index: 1, kind: input, shape index: {}]
  %s2 = inlined_call_operand.vmem [shape: f32[8,4], index: 2, kind: input, shape index: {}]
  %s3 = inlined_call_operand.vmem [shape: f32[8,4], index: 3, kind: input, shape index: {}]
  %s4 = inlined_call_operand.vmem [shape: f32[8,1], index: 4, kind: input, shape index: {}]
  %s5 = inlined_call_operand.vmem [shape: f32[8,1], index: 5, kind: input, shape index: {}]
  %s6 = inlined_call_operand.<no memory space> [shape: f32[1,1], index: 6, kind: input, shape index: {}]
  %s7 = inlined_call_operand.hbm [shape: f32[2,4,256], index: 7, kind: output, shape index: {}]
  %s8 = sld [smem:[#allocation0]]
  $region65: #{tpu_custom_call.1} parent=0
    _
  %s10 = ssub.s32 1, %s8
  %s11 = scalar_select 0, %s10, %s8
  %v12 = vstv %s6
  %13 = vst [vmem:[#allocation2] sm:$0x1] %v12
  $region1: #{tpu_custom_call.1} parent=0
    #allocation3 [shape = 'u8[8192]{0}', space=vmem, size = 0x2000, scoped, tag = 'input window, operand 1']
    #allocation4 [shape = 's32[2]{0}', space=sflag, size = 0x8, scoped, tag = 'scoped memory for tpu_custom_call.1']
    #allocation5 [shape = 's32[2]{0}', space=sflag, size = 0x8, scoped, tag = 'scoped memory for tpu_custom_call.1']
    #allocation6 [shape = 'u8[8192]{0}', space=vmem, size = 0x2000, scoped, tag = 'output window, operand 0']
    %14 = vsyncpa [#allocation4], 0
    %s15 = scalar_lea.sflag [#allocation4], 1
    %16 = vsyncpa %s15, 0
    %17 = vsyncpa [#allocation5], 0
    %s18 = scalar_lea.sflag [#allocation5], 1
    %19 = vsyncpa %s18, 0
    loop: start=0, step=1, limit=4
    $region2: #{tpu_custom_call.1} parent=1 // loop_pre_header
      _
    $region3: #{tpu_custom_call.1} parent=1 // loop_header
      %s21 = sphi 0, %s25
      %p22 = scmp.ge.s32.totalorder %s21, 4
      %s28 = sphi 0, %s40
      %s29 = sphi 0, %s36
      %s30 = sphi 0, %s28
      %s31 = sphi 0, %s29
      %s32 = sphi 0, %s30
      %s33 = sphi 0, %s31
      %s45 = sphi 0, %s47
      %s48 = sphi 0, %s45
      %s49 = sphi 0, %s48
      %s65 = sphi 0, %s49
      %s73 = sphi 0, %s75
      %s76 = sphi 0, %s73
      %s77 = sphi 0, %s76
      %s93 = sphi 0, %s77
      %s97 = sphi 0, %s97
      %s99 = sphi 0, %s97
      %s100 = sphi 0, %s99
      %s114 = sphi 0, %s100
      %s118 = sphi 0, %s118
      %s120 = sphi 0, %s118
      %s121 = sphi 0, %s120
      %s135 = sphi 0, %s121
      %s139 = sphi 0, %s139
      %s141 = sphi 0, %s139
      %s142 = sphi 0, %s141
      %s156 = sphi 0, %s142
      %s160 = sphi 0, %s160
      %s162 = sphi 0, %s160
      %s163 = sphi 0, %s162
      %s177 = sphi 0, %s163
      %s181 = sphi 0, %s181
      %s183 = sphi 0, %s181
      %s184 = sphi 0, %s183
      %s198 = sphi 0, %s184
      %s206 = sphi 0, %s208
      %s209 = sphi 0, %s206
      %s210 = sphi 0, %s209
      %s226 = sphi 0, %s210
    $region4: #{tpu_custom_call.1} parent=1 // loop_header_branch
      %24 = sbr.rel (%p22) target = $region8
    $region5: #{tpu_custom_call.1} parent=1 // loop_body
      %s26 = ssub.s32 %s21, 1
      %s27 = ssub.s32 %s21, 2
      %s34 = sadd.s32 1, %s29
      %p35 = scmp.ge.s32.totalorder %s34, 1
      %s36 = scalar_select %p35, 0, %s34
      %s37 = sadd.s32 1, %s28
      %s38 = scalar_select %p35, %s37, %s28
      %p39 = scmp.ge.s32.totalorder %s38, 2
      %s40 = scalar_select %p39, 0, %s38
      %s41 = ssub.s32 %s28, %s40
      %s42 = ssub.s32 %s29, %s36
      %s43 = sor.u32 %s41, %s42
      %p44 = scmp.eq.s32.totalorder %s43, 0
      %s46 = sadd.s32 %s45, 1
      %s47 = scalar_select %p44, %s45, %s46
      %p50 = pneg %p44
      %p51 = scmp.eq.s32.totalorder %s21, 1
      %p52 = por %p50, %p51
      %p53 = scmp.ne.s32.totalorder %s45, %s48
      %p54 = scmp.eq.s32.totalorder %s21, 0
      %p55 = por %p53, %p54
      %p56 = scmp.ne.s32.totalorder %s45, %s48
      %p57 = scmp.eq.s32.totalorder %s26, 1
      %p58 = por %p56, %p57
      %p59 = scmp.ne.s32.totalorder %s48, %s49
      %p60 = scmp.eq.s32.totalorder %s26, 0
      %p61 = por %p59, %p60
      %p62 = scmp.ne.s32.totalorder %s48, %s49
      %p63 = scmp.eq.s32.totalorder %s27, 1
      %p64 = por %p62, %p63
      %p66 = scmp.ne.s32.totalorder %s49, %s65
      %p67 = scmp.eq.s32.totalorder %s27, 0
      %p68 = por %p66, %p67
      %s69 = ssub.s32 %s28, %s40
      %s70 = ssub.s32 %s29, %s36
      %s71 = sor.u32 %s69, %s70
      %p72 = scmp.eq.s32.totalorder %s71, 0
      %s74 = sadd.s32 %s73, 1
      %s75 = scalar_select %p72, %s73, %s74
      %p78 = pneg %p72
      %p79 = scmp.eq.s32.totalorder %s21, 1
      %p80 = por %p78, %p79
      %p81 = scmp.ne.s32.totalorder %s73, %s76
      %p82 = scmp.eq.s32.totalorder %s21, 0
      %p83 = por %p81, %p82
      %p84 = scmp.ne.s32.totalorder %s73, %s76
      %p85 = scmp.eq.s32.totalorder %s26, 1
      %p86 = por %p84, %p85
      %p87 = scmp.ne.s32.totalorder %s76, %s77
      %p88 = scmp.eq.s32.totalorder %s26, 0
      %p89 = por %p87, %p88
      %p90 = scmp.ne.s32.totalorder %s76, %s77
      %p91 = scmp.eq.s32.totalorder %s27, 1
      %p92 = por %p90, %p91
      %p94 = scmp.ne.s32.totalorder %s77, %s93
      %p95 = scmp.eq.s32.totalorder %s27, 0
      %p96 = por %p94, %p95
      %s98 = sadd.s32 %s97, 1
      %p101 = scmp.eq.s32.totalorder %s21, 1
      %p102 = scmp.ne.s32.totalorder %s97, %s99
      %p103 = scmp.eq.s32.totalorder %s21, 0
      %p104 = por %p102, %p103
      %p105 = scmp.ne.s32.totalorder %s97, %s99
      %p106 = scmp.eq.s32.totalorder %s26, 1
      %p107 = por %p105, %p106
      %p108 = scmp.ne.s32.totalorder %s99, %s100
      %p109 = scmp.eq.s32.totalorder %s26, 0
      %p110 = por %p108, %p109
      %p111 = scmp.ne.s32.totalorder %s99, %s100
      %p112 = scmp.eq.s32.totalorder %s27, 1
      %p113 = por %p111, %p112
      %p115 = scmp.ne.s32.totalorder %s100, %s114
      %p116 = scmp.eq.s32.totalorder %s27, 0
      %p117 = por %p115, %p116
      %s119 = sadd.s32 %s118, 1
      %p122 = scmp.eq.s32.totalorder %s21, 1
      %p123 = scmp.ne.s32.totalorder %s118, %s120
      %p124 = scmp.eq.s32.totalorder %s21, 0
      %p125 = por %p123, %p124
      %p126 = scmp.ne.s32.totalorder %s118, %s120
      %p127 = scmp.eq.s32.totalorder %s26, 1
      %p128 = por %p126, %p127
      %p129 = scmp.ne.s32.totalorder %s120, %s121
      %p130 = scmp.eq.s32.totalorder %s26, 0
      %p131 = por %p129, %p130
      %p132 = scmp.ne.s32.totalorder %s120, %s121
      %p133 = scmp.eq.s32.totalorder %s27, 1
      %p134 = por %p132, %p133
      %p136 = scmp.ne.s32.totalorder %s121, %s135
      %p137 = scmp.eq.s32.totalorder %s27, 0
      %p138 = por %p136, %p137
      %s140 = sadd.s32 %s139, 1
      %p143 = scmp.eq.s32.totalorder %s21, 1
      %p144 = scmp.ne.s32.totalorder %s139, %s141
      %p145 = scmp.eq.s32.totalorder %s21, 0
      %p146 = por %p144, %p145
      %p147 = scmp.ne.s32.totalorder %s139, %s141
      %p148 = scmp.eq.s32.totalorder %s26, 1
      %p149 = por %p147, %p148
      %p150 = scmp.ne.s32.totalorder %s141, %s142
      %p151 = scmp.eq.s32.totalorder %s26, 0
      %p152 = por %p150, %p151
      %p153 = scmp.ne.s32.totalorder %s141, %s142
      %p154 = scmp.eq.s32.totalorder %s27, 1
      %p155 = por %p153, %p154
      %p157 = scmp.ne.s32.totalorder %s142, %s156
      %p158 = scmp.eq.s32.totalorder %s27, 0
      %p159 = por %p157, %p158
      %s161 = sadd.s32 %s160, 1
      %p164 = scmp.eq.s32.totalorder %s21, 1
      %p165 = scmp.ne.s32.totalorder %s160, %s162
      %p166 = scmp.eq.s32.totalorder %s21, 0
      %p167 = por %p165, %p166
      %p168 = scmp.ne.s32.totalorder %s160, %s162
      %p169 = scmp.eq.s32.totalorder %s26, 1
      %p170 = por %p168, %p169
      %p171 = scmp.ne.s32.totalorder %s162, %s163
      %p172 = scmp.eq.s32.totalorder %s26, 0
      %p173 = por %p171, %p172
      %p174 = scmp.ne.s32.totalorder %s162, %s163
      %p175 = scmp.eq.s32.totalorder %s27, 1
      %p176 = por %p174, %p175
      %p178 = scmp.ne.s32.totalorder %s163, %s177
      %p179 = scmp.eq.s32.totalorder %s27, 0
      %p180 = por %p178, %p179
      %s182 = sadd.s32 %s181, 1
      %p185 = scmp.eq.s32.totalorder %s21, 1
      %p186 = scmp.ne.s32.totalorder %s181, %s183
      %p187 = scmp.eq.s32.totalorder %s21, 0
      %p188 = por %p186, %p187
      %p189 = scmp.ne.s32.totalorder %s181, %s183
      %p190 = scmp.eq.s32.totalorder %s26, 1
      %p191 = por %p189, %p190
      %p192 = scmp.ne.s32.totalorder %s183, %s184
      %p193 = scmp.eq.s32.totalorder %s26, 0
      %p194 = por %p192, %p193
      %p195 = scmp.ne.s32.totalorder %s183, %s184
      %p196 = scmp.eq.s32.totalorder %s27, 1
      %p197 = por %p195, %p196
      %p199 = scmp.ne.s32.totalorder %s184, %s198
      %p200 = scmp.eq.s32.totalorder %s27, 0
      %p201 = por %p199, %p200
      %s202 = ssub.s32 %s28, %s40
      %s203 = ssub.s32 %s29, %s36
      %s204 = sor.u32 %s202, %s203
      %p205 = scmp.eq.s32.totalorder %s204, 0
      %s207 = sadd.s32 %s206, 1
      %s208 = scalar_select %p205, %s206, %s207
      %p211 = pneg %p205
      %p212 = scmp.eq.s32.totalorder %s21, 1
      %p213 = por %p211, %p212
      %p214 = scmp.ne.s32.totalorder %s206, %s209
      %p215 = scmp.eq.s32.totalorder %s21, 0
      %p216 = por %p214, %p215
      %p217 = scmp.ne.s32.totalorder %s206, %s209
      %p218 = scmp.eq.s32.totalorder %s26, 1
      %p219 = por %p217, %p218
      %p220 = scmp.ne.s32.totalorder %s209, %s210
      %p221 = scmp.eq.s32.totalorder %s26, 0
      %p222 = por %p220, %p221
      %p223 = scmp.ne.s32.totalorder %s209, %s210
      %p224 = scmp.eq.s32.totalorder %s27, 1
      %p225 = por %p223, %p224
      %p227 = scmp.ne.s32.totalorder %s210, %s226
      %p228 = scmp.eq.s32.totalorder %s27, 0
      %p229 = por %p227, %p228
      %p230 = scmp.le.s32.totalorder 1, %s21
      %p231 = scmp.lt.s32.totalorder %s21, 3
      %p232 = pnand %p230, %p231
      %p233 = pneg %p232
      // Predicated region
      $region9: #{tpu_custom_call.1} parent=5 // pred_check
        _
      $region10: #{tpu_custom_call.1} parent=5 // pred_check_branch
        %235 = sbr.rel (%p232) target = $region12
      $region11: #{tpu_custom_call.1} parent=5 // pred_region
        %s236 = ssub.s32 %s21, 1
        // Predicated region
        $region13: #{tpu_custom_call.1} parent=11 // pred_check
          %p237 = pneg %p110
        $region14: #{tpu_custom_call.1} parent=11 // pred_check_branch
          %239 = sbr.rel (%p237) target = $region16
        $region15: #{tpu_custom_call.1} parent=11 // pred_region
          _
        $region16: #{tpu_custom_call.1} parent=11 // pred_fallthru
          _
        // Predicated region
        $region17: #{tpu_custom_call.1} parent=11 // pred_check
          %p240 = pneg %p131
        $region18: #{tpu_custom_call.1} parent=11 // pred_check_branch
          %242 = sbr.rel (%p240) target = $region20
        $region19: #{tpu_custom_call.1} parent=11 // pred_region
          _
        $region20: #{tpu_custom_call.1} parent=11 // pred_fallthru
          _
        // Predicated region
        $region21: #{tpu_custom_call.1} parent=11 // pred_check
          %p243 = pneg %p152
        $region22: #{tpu_custom_call.1} parent=11 // pred_check_branch
          %245 = sbr.rel (%p243) target = $region24
        $region23: #{tpu_custom_call.1} parent=11 // pred_region
          _
        $region24: #{tpu_custom_call.1} parent=11 // pred_fallthru
          _
        // Predicated region
        $region25: #{tpu_custom_call.1} parent=11 // pred_check
          %p246 = pneg %p173
        $region26: #{tpu_custom_call.1} parent=11 // pred_check_branch
          %248 = sbr.rel (%p246) target = $region28
        $region27: #{tpu_custom_call.1} parent=11 // pred_region
          _
        $region28: #{tpu_custom_call.1} parent=11 // pred_fallthru
          _
        // Predicated region
        $region29: #{tpu_custom_call.1} parent=11 // pred_check
          %p249 = pneg %p194
        $region30: #{tpu_custom_call.1} parent=11 // pred_check_branch
          %251 = sbr.rel (%p249) target = $region32
        $region31: #{tpu_custom_call.1} parent=11 // pred_region
          _
        $region32: #{tpu_custom_call.1} parent=11 // pred_fallthru
          _
      $region12: #{tpu_custom_call.1} parent=5 // pred_fallthru
        _
      %p252 = scmp.lt.s32.totalorder %s21, 2
      // Predicated region
      $region33: #{tpu_custom_call.1} parent=5 // pred_check
        %p253 = pneg %p252
      $region34: #{tpu_custom_call.1} parent=5 // pred_check_branch
        %255 = sbr.rel (%p253) target = $region36
      $region35: #{tpu_custom_call.1} parent=5 // pred_region
        // Predicated region
        $region37: #{tpu_custom_call.1} parent=35 // pred_check
          %p256 = pneg %p55
        $region38: #{tpu_custom_call.1} parent=35 // pred_check_branch
          %258 = sbr.rel (%p256) target = $region40
        $region39: #{tpu_custom_call.1} parent=35 // pred_region
          %s259 = smul.u32 2, %s29
          %p260 = scmp.lt.s32.totalorder %s28, 1
          %s261 = scalar_select %p260, %s28, 1
          %p262 = scmp.lt.s32.totalorder %s259, 1
          %s263 = scalar_select %p262, %s259, 1
          %s264 = smul.addr %s261, 2
          %s265 = sadd.s32 %s263, %s264
          %s266 = smul.addr %s265, 4
          %s267 = scalar_lea.vmem %s0, %s266
          %s268 = smul.u32 2, %s29
        $region40: #{tpu_custom_call.1} parent=35 // pred_fallthru
          _
        // Predicated region
        $region41: #{tpu_custom_call.1} parent=35 // pred_check
          %p269 = pneg %p83
        $region42: #{tpu_custom_call.1} parent=35 // pred_check_branch
          %271 = sbr.rel (%p269) target = $region44
        $region43: #{tpu_custom_call.1} parent=35 // pred_region
          %s272 = sand.u32 %s73, 1
          %s273 = scalar_lea.sflag [#allocation4], %s272
          %s274 = sand.u32 %s73, 1
          %s275 = smul.addr %s274, 8
          %s276 = scalar_lea.vmem [#allocation3], %s275
          %s277 = smul.u32 2, %s29
          %279 = vsyncadd %s273, 0
          %s280 = smul.addr %s28, 2
          %s281 = sadd.s32 %s277, %s280
          %s282 = smul.addr %s281, 4
          %s283 = scalar_lea.hbm %s1, %s282
          %s285 = sshll.u32 %s283, 4
          %s286 = int_to_ptr.hbm [resolvable:$true] %s285
          %s287 = sshll.u32 %s276, 4
          %s288 = int_to_ptr.vmem [resolvable:$true] %s287
          %290 = dma.hbm_to_vmem [thread:$0]  %s286, 128, %s288, %s273
        $region44: #{tpu_custom_call.1} parent=35 // pred_fallthru
          _
      $region36: #{tpu_custom_call.1} parent=5 // pred_fallthru
        _
      %p291 = scmp.le.s32.totalorder 1, %s21
      %p292 = scmp.lt.s32.totalorder %s21, 3
      %p293 = pnand %p291, %p292
      %p294 = pneg %p293
      // Predicated region
      $region45: #{tpu_custom_call.1} parent=5 // pred_check
        _
      $region46: #{tpu_custom_call.1} parent=5 // pred_check_branch
        %296 = sbr.rel (%p293) target = $region48
      $region47: #{tpu_custom_call.1} parent=5 // pred_region
        %s297 = ssub.s32 %s21, 1
        %s298 = sand.u32 %s76, 1
        %s299 = scalar_lea.sflag [#allocation4], %s298
        %s300 = sand.u32 %s76, 1
        %s301 = smul.addr %s300, 8
        %s302 = scalar_lea.vmem [#allocation3], %s301
        // Predicated region
        $region49: #{tpu_custom_call.1} parent=47 // pred_check
          %p303 = pneg %p89
        $region50: #{tpu_custom_call.1} parent=47 // pred_check_branch
          %305 = sbr.rel (%p303) target = $region52
        $region51: #{tpu_custom_call.1} parent=47 // pred_region
          %307 = dma.done %s299, 128
        $region52: #{tpu_custom_call.1} parent=47 // pred_fallthru
          _
        %s308 = smul.u32 2, %s31
        %p309 = scmp.lt.s32.totalorder %s30, 1
        %s310 = scalar_select %p309, %s30, 1
        %p311 = scmp.lt.s32.totalorder %s308, 1
        %s312 = scalar_select %p311, %s308, 1
        %s313 = smul.addr %s310, 2
        %s314 = sadd.s32 %s312, %s313
        %s315 = smul.addr %s314, 4
        %s316 = scalar_lea.vmem %s0, %s315
        %p317 = pneg %p61
        %p318 = pneg %p58
        %s319 = sand.u32 %s76, 1
        %s320 = scalar_lea.sflag [#allocation4], %s319
        %s321 = sand.u32 %s76, 1
        %s322 = smul.addr %s321, 8
        %s323 = scalar_lea.vmem [#allocation3], %s322
        %p324 = pneg %p89
        %p325 = pneg %p86
        %p326 = pneg %p110
        %p327 = pneg %p107
        %p328 = pneg %p131
        %p329 = pneg %p128
        %p330 = pneg %p152
        %p331 = pneg %p149
        %p332 = pneg %p173
        %p333 = pneg %p170
        %p334 = pneg %p194
        %p335 = pneg %p191
        %p336 = pneg %p222
        %p337 = pneg %p219
        %s338 = sand.u32 %s209, 1
        %s339 = scalar_lea.sflag [#allocation5], %s338
        %s340 = sand.u32 %s209, 1
        %s341 = smul.addr %s340, 8
        %s342 = scalar_lea.vmem [#allocation6], %s341
        %s343 = smul.u32 2, %s31
        %p344 = scmp.lt.s32.totalorder %s30, 1
        %s345 = scalar_select %p344, %s30, 1
        %p346 = scmp.lt.s32.totalorder %s343, 1
        %s347 = scalar_select %p346, %s343, 1
        %s348 = smul.addr %s345, 2
        %s349 = sadd.s32 %s347, %s348
        %s350 = smul.addr %s349, 4
        %s351 = scalar_lea.vmem %s0, %s350
        %s352 = smul.u32 2, %s31
        %s353 = smul.u32 2, %s31
        %s354 = smul.u32 2, %s31
        %v355 = vld [vmem:[%s351] sm:$0xff]
        %v356 = vld [vmem:[%s302] sm:$0xff]
        %v357 = vld [vmem:[%s2] sm:$0xff]
        %v358 = vld [vmem:[%s3] sm:$0xff]
        %360 = vset.pattern.permute.xlu0 0
        %361 = vperm.xlu0 %360, %v357
        %v362 = vpop.permute.xlu0 %361
        %v365 = vperm.slane %v355, 0
        %v366 = vperm.slane %v355, 4
        %v369 = vperm.slane %v365, 0
        %v370 = vperm.slane %v366, 0
        %v371 = vmul.f32 %v362, %v369
        %v372 = vmul.f32 %v362, %v370
        %373 = vset.pattern.permute.xlu0 1
        %374 = vperm.xlu0 %373, %v357
        %v375 = vpop.permute.xlu0 %374
        %v377 = vperm.slane %v355, 1
        %v378 = vperm.slane %v355, 5
        %v381 = vperm.slane %v377, 1
        %v382 = vperm.slane %v378, 1
        %v383 = vmul.f32 %v375, %v381
        %v384 = vmul.f32 %v375, %v382
        %v385 = vadd.f32 %v371, %v383
        %v386 = vadd.f32 %v372, %v384
        %387 = vset.pattern.permute.xlu0 2
        %388 = vperm.xlu0 %387, %v357
        %v389 = vpop.permute.xlu0 %388
        %v391 = vperm.slane %v355, 2
        %v392 = vperm.slane %v355, 6
        %v395 = vperm.slane %v391, 2
        %v396 = vperm.slane %v392, 2
        %v397 = vmul.f32 %v389, %v395
        %v398 = vmul.f32 %v389, %v396
        %v399 = vadd.f32 %v385, %v397
        %v400 = vadd.f32 %v386, %v398
        %401 = vset.pattern.permute.xlu0 3
        %402 = vperm.xlu0 %401, %v357
        %v403 = vpop.permute.xlu0 %402
        %v405 = vperm.slane %v355, 3
        %v406 = vperm.slane %v355, 7
        %v409 = vperm.slane %v405, 3
        %v410 = vperm.slane %v406, 3
        %v411 = vmul.f32 %v403, %v409
        %v412 = vmul.f32 %v403, %v410
        %v413 = vadd.f32 %v399, %v411
        %v414 = vadd.f32 %v400, %v412
        %416 = vset.pattern.permute.xlu0 0
        %417 = vperm.xlu0 %416, %v358
        %v418 = vpop.permute.xlu0 %417
        %v421 = vperm.slane %v356, 0
        %v422 = vperm.slane %v356, 4
        %v425 = vperm.slane %v421, 0
        %v426 = vperm.slane %v422, 0
        %v427 = vmul.f32 %v418, %v425
        %v428 = vmul.f32 %v418, %v426
        %v429 = vadd.f32 %v413, %v427
        %v430 = vadd.f32 %v414, %v428
        %431 = vset.pattern.permute.xlu0 1
        %432 = vperm.xlu0 %431, %v358
        %v433 = vpop.permute.xlu0 %432
        %v435 = vperm.slane %v356, 1
        %v436 = vperm.slane %v356, 5
        %v439 = vperm.slane %v435, 1
        %v440 = vperm.slane %v436, 1
        %v441 = vmul.f32 %v433, %v439
        %v442 = vmul.f32 %v433, %v440
        %v443 = vadd.f32 %v429, %v441
        %v444 = vadd.f32 %v430, %v442
        %445 = vset.pattern.permute.xlu0 2
        %446 = vperm.xlu0 %445, %v358
        %v447 = vpop.permute.xlu0 %446
        %v449 = vperm.slane %v356, 2
        %v450 = vperm.slane %v356, 6
        %v453 = vperm.slane %v449, 2
        %v454 = vperm.slane %v450, 2
        %v455 = vmul.f32 %v447, %v453
        %v456 = vmul.f32 %v447, %v454
        %v457 = vadd.f32 %v443, %v455
        %v458 = vadd.f32 %v444, %v456
        %459 = vset.pattern.permute.xlu0 3
        %460 = vperm.xlu0 %459, %v358
        %v461 = vpop.permute.xlu0 %460
        %v463 = vperm.slane %v356, 3
        %v464 = vperm.slane %v356, 7
        %v467 = vperm.slane %v463, 3
        %v468 = vperm.slane %v464, 3
        %v469 = vmul.f32 %v461, %v467
        %v470 = vmul.f32 %v461, %v468
        %v471 = vadd.f32 %v457, %v469
        %v472 = vadd.f32 %v458, %v470
        %v473 = vld [vmem:[%s4] sm:$0xff]
        %475 = vset.pattern.permute.xlu0 0
        %476 = vperm.xlu0 %475, %v473
        %v477 = vpop.permute.xlu0 %476
        %v479 = vadd.f32 %v471, %v477
        %v480 = vadd.f32 %v472, %v477
        %v481 = vmax.f32 %v479, 0.0
        %v482 = vmax.f32 %v480, 0.0
        %v483 = vld [vmem:[%s5] sm:$0xff]
        %485 = vset.pattern.permute.xlu0 0
        %486 = vperm.xlu0 %485, %v483
        %v487 = vpop.permute.xlu0 %486
        %v489 = vmul.f32 %v487, %v481
        %v490 = vmul.f32 %v487, %v482
        %v491 = vrot.slane %v489, 4
        %v492 = vadd.f32 %v489, %v491
        %v493 = vrot.slane %v492, 2
        %v494 = vadd.f32 %v492, %v493
        %v495 = vrot.slane %v494, 1
        %v496 = vadd.f32 %v494, %v495
        %v497 = vrot.slane %v490, 4
        %v498 = vadd.f32 %v490, %v497
        %v499 = vrot.slane %v498, 2
        %v500 = vadd.f32 %v498, %v499
        %v501 = vrot.slane %v500, 1
        %v502 = vadd.f32 %v500, %v501
        %v503 = vld [vmem:[#allocation2] sm:$0x1]
        %505 = vset.pattern.permute.xlu0 0
        %506 = vperm.xlu0 %505, %v503
        %v507 = vpop.permute.xlu0 %506
        %v509 = vperm.slane %v507, 0
        %v510 = vadd.f32 %v496, %v509
        %v511 = vadd.f32 %v502, %v509
        %v512 = vsub.f32 0.0, %v510
        %v513 = vsub.f32 0.0, %v511
        %v514 = vmul.f32 %v512, 1.442695
        %v515 = vpow.pop %v514
        %v516 = vmul.f32 %v513, 1.442695
        %v517 = vpow.pop %v516
        %v518 = vadd.f32 %v515, 1.0
        %v519 = vadd.f32 %v517, 1.0
        %v520 = vrcp.pop %v518
        %v521 = vmul.f32 %v518, %v520
        %v522 = vsub.f32 1.0, %v521
        %v523 = vmul.f32 %v520, %v522
        %v524 = vadd.f32 %v520, %v523
        %vm525 = vweird.f32 %v518
        %vm526 = vweird.f32 %v520
        %vm527 = vmor %vm525, %vm526
        %v528 = vsel %vm527, %v520, %v524
        %v529 = vand.u32 2147483647, %v518
        %vm530 = vcmp.eq.f32.partialorder %v529, 8.507059e+37
        %v531 = vand.u32 %v518, 2147483648
        %v532 = vor.u32 1.1754944e-38, %v531
        %v533 = vsel %vm530, %v532, %v528
        %v534 = vrcp.pop %v519
        %v535 = vmul.f32 %v519, %v534
        %v536 = vsub.f32 1.0, %v535
        %v537 = vmul.f32 %v534, %v536
        %v538 = vadd.f32 %v534, %v537
        %vm539 = vweird.f32 %v519
        %vm540 = vweird.f32 %v534
        %vm541 = vmor %vm539, %vm540
        %v542 = vsel %vm541, %v534, %v538
        %v543 = vand.u32 2147483647, %v519
        %vm544 = vcmp.eq.f32.partialorder %v543, 8.507059e+37
        %v545 = vand.u32 %v519, 2147483648
        %v546 = vor.u32 1.1754944e-38, %v545
        %v547 = vsel %vm544, %v546, %v542
        %v550 = vrot.slane %v547, 4
        %vm551 = vcmask 1043456
        %v552 = vsel %vm551, %v533, %v550
        %v554 = vmul.f32 %v356, %v552
        %555 = vst [vmem:[%s342] sm:$0xff] %v554
        %s556 = sand.u32 %s209, 1
        %s557 = scalar_lea.sflag [#allocation5], %s556
        %s558 = sand.u32 %s209, 1
        %s559 = smul.addr %s558, 8
        %s560 = scalar_lea.vmem [#allocation6], %s559
        // Predicated region
        $region53: #{tpu_custom_call.1} parent=47 // pred_check
          %p561 = pneg %p219
        $region54: #{tpu_custom_call.1} parent=47 // pred_check_branch
          %563 = sbr.rel (%p561) target = $region56
        $region55: #{tpu_custom_call.1} parent=47 // pred_region
          %s564 = smul.u32 2, %s31
          %566 = vsyncadd %s557, 0
          %s567 = smul.addr %s30, 2
          %s568 = sadd.s32 %s564, %s567
          %s569 = smul.addr %s568, 4
          %s570 = scalar_lea.hbm %s7, %s569
          %s572 = sshll.u32 %s560, 4
          %s573 = int_to_ptr.vmem [resolvable:$true] %s572
          %s574 = sshll.u32 %s570, 4
          %s575 = int_to_ptr.hbm [resolvable:$true] %s574
          %577 = dma.vmem_to_hbm [thread:$0]  %s573, 128, %s575, %s557
        $region56: #{tpu_custom_call.1} parent=47 // pred_fallthru
          _
      $region48: #{tpu_custom_call.1} parent=5 // pred_fallthru
        _
      %p578 = scmp.le.s32.totalorder 2, %s21
      // Predicated region
      $region57: #{tpu_custom_call.1} parent=5 // pred_check
        %p579 = pneg %p578
      $region58: #{tpu_custom_call.1} parent=5 // pred_check_branch
        %581 = sbr.rel (%p579) target = $region60
      $region59: #{tpu_custom_call.1} parent=5 // pred_region
        %s582 = ssub.s32 %s21, 2
        // Predicated region
        $region61: #{tpu_custom_call.1} parent=59 // pred_check
          %p583 = pneg %p225
        $region62: #{tpu_custom_call.1} parent=59 // pred_check_branch
          %585 = sbr.rel (%p583) target = $region64
        $region63: #{tpu_custom_call.1} parent=59 // pred_region
          %s586 = sand.u32 %s210, 1
          %s587 = scalar_lea.sflag [#allocation5], %s586
          %s588 = sand.u32 %s210, 1
          %s589 = smul.addr %s588, 8
          %s590 = scalar_lea.vmem [#allocation6], %s589
          %592 = dma.done %s587, 128
        $region64: #{tpu_custom_call.1} parent=59 // pred_fallthru
          _
      $region60: #{tpu_custom_call.1} parent=5 // pred_fallthru
        _
    $region6: #{tpu_custom_call.1} parent=1 // loop_footer
      %s25 = sadd.s32 1, %s21
    $region7: #{tpu_custom_call.1} parent=1 // loop_footer_branch
      %20 = sbr.rel target = $region3
    $region8: #{tpu_custom_call.1} parent=1 // loop_exit
      _
    %593 = vsyncpa [#allocation4], 1
    %s594 = scalar_lea.sflag [#allocation4], 1
    %595 = vsyncpa %s594, 1
    %596 = vsyncpa [#allocation5], 1
    %s597 = scalar_lea.sflag [#allocation5], 1
    %598 = vsyncpa %s597, 1

</llo_original>
